<compile_context>
chip_gen: v5e
topology: v5e:2x2
jax: 0.10.0
libtpu: 0.0.40
codegen_flags: <defaults>
</compile_context>

<pallas_src>
import functools

import jax
import jax.numpy as jnp
from jax import lax
from jax.experimental import pallas as pl
from jax.experimental.pallas import tpu as pltpu


def _reward_kernel(ids_ref, final_ref, scores_ref, acc_ref, *,
                   seq_len, ts, mask_tail):
    """One (TB, TS) tile. Grid = (B tiles, S tiles); S is the reduction axis."""
    j = pl.program_id(1)

    @pl.when(j == 0)
    def _init():
        acc_ref[...] = jnp.zeros_like(acc_ref)

    # Partial row-sum for this S tile (f32 accumulation; output is bf16 so
    # low-order-bit loss for very long sequences is immaterial).
    ids_f32 = ids_ref[...].astype(jnp.float32)                      # (TB, TS)
    if mask_tail:
        # S not divisible by TS: zero out the padded tail columns of the last
        # S tile so they do not pollute the row sums.
        col = lax.broadcasted_iota(jnp.int32, ids_f32.shape, 1) + j * ts
        ids_f32 = jnp.where(col < seq_len, ids_f32, 0.0)
    acc_ref[...] += jnp.sum(ids_f32, axis=-1, keepdims=True)        # (TB, 1)

    # final_scores is zero everywhere except the very last sequence position.
    final_ref[...] = jnp.zeros_like(final_ref)

    @pl.when(j == pl.num_programs(1) - 1)
    def _finalize():
        # Surrogate score: 0.01 * mean(token id) per row.
        scale = jnp.float32(0.01) / jnp.float32(seq_len)
        score = (acc_ref[...] * scale).astype(jnp.bfloat16)         # (TB, 1)
        last_local = (seq_len - 1) % ts                              # static int
        final_ref[:, last_local:last_local + 1] = score              # narrow store
        scores_ref[...] = score                                      # (TB, 1) output


def _vmem_limit_bytes():
    """Per-generation scoped-VMEM budget: ~48 MiB on 64-MiB parts (v7x),
    64 MiB on 128-MiB parts (v5e/v6e)."""
    cap = 128 * 1024 * 1024
    try:
        info = pltpu.get_tpu_info()
        cap = int(getattr(info, "vmem_capacity_bytes", cap))
    except Exception:
        pass
    return min(64 * 1024 * 1024, (cap * 3) // 4)


def _pick_tiles(B, S, tb_pref, ts_pref, vmem_limit):
    """Choose (TB, TS). TB is a multiple of 16 (bf16 sublane packing) unless it
    equals the full batch; large batches get >= 2 batch tiles (v7x megacore).
    TS is a multiple of 128 unless it equals the full sequence. Tiles are shrunk
    to keep the double-buffered working set under ~70% of the VMEM budget."""
    # Batch tile.
    if B <= 16:
        TB = B                                       # full-dim block is always legal
    elif B < 32:
        TB = 16
    else:
        TB = min(tb_pref, max(16, ((B // 2) // 16) * 16))  # >= 2 batch tiles
    # Sequence tile.
    if S <= ts_pref:
        TS = S                                       # full-dim block is always legal
    else:
        TS = max(128, (ts_pref // 128) * 128)

    def working_set(tb, ts):
        # double-buffered int32 input + bf16 output tiles, plus scores out + scratch
        return 2 * tb * ts * (4 + 2) + 2 * tb * 2 + tb * 4

    budget = (vmem_limit * 7) // 10
    while working_set(TB, TS) > budget and TS > 128:
        TS = max(128, ((TS // 2 + 127) // 128) * 128)
    while working_set(TB, TS) > budget and TB > 16:
        TB = max(16, ((TB // 2 + 15) // 16) * 16)
    return TB, TS


def reward_from_function_forward(input_ids, *, tb_pref=256, ts_pref=8192):
    """input_ids: (B, S) int. Returns (final_scores, scores_tensor, last_token_indices)."""
    input_ids = input_ids.astype(jnp.int32)
    B, S = input_ids.shape

    vmem_limit = _vmem_limit_bytes()
    TB, TS = _pick_tiles(B, S, tb_pref, ts_pref, vmem_limit)
    grid = (pl.cdiv(B, TB), pl.cdiv(S, TS))
    mask_tail = (S % TS) != 0

    kernel = functools.partial(_reward_kernel, seq_len=S, ts=TS, mask_tail=mask_tail)

    final2d, scores2d = pl.pallas_call(
        kernel,
        out_shape=(
            jax.ShapeDtypeStruct((B, S), jnp.bfloat16),
            jax.ShapeDtypeStruct((B, 1), jnp.bfloat16),
        ),
        grid_spec=pltpu.PrefetchScalarGridSpec(
            num_scalar_prefetch=0,
            grid=grid,
            in_specs=[pl.BlockSpec((TB, TS), lambda i, j: (i, j))],
            out_specs=[
                pl.BlockSpec((TB, TS), lambda i, j: (i, j)),
                pl.BlockSpec((TB, 1), lambda i, j: (i, 0)),   # resident across j
            ],
            scratch_shapes=[pltpu.VMEM((TB, 1), jnp.float32)],
        ),
        compiler_params=pltpu.CompilerParams(
            dimension_semantics=("parallel", "arbitrary"),
            vmem_limit_bytes=vmem_limit,
        ),
    )(input_ids)

    final_scores = final2d[:, :, None]                           # (B, S, 1) bf16
    scores_tensor = scores2d[:, 0]                               # (B,) bf16, contiguous
    # Data-independent constant; cheaper in the wrapper than as a kernel output.
    # TODO(synk): torch.long -> int32 here (jax x64 disabled by default).
    last_token_indices = jnp.full((B,), S - 1, dtype=jnp.int32)
    return final_scores, scores_tensor, last_token_indices


def _check(input_ids, final_scores, scores_tensor, last_token_indices):
    B, S = input_ids.shape
    assert final_scores.shape == (B, S, 1) and final_scores.dtype == jnp.bfloat16
    assert scores_tensor.shape == (B,) and scores_tensor.dtype == jnp.bfloat16
    assert last_token_indices.shape == (B,)
    ref = (jnp.mean(input_ids.astype(jnp.float32), axis=-1) * 0.01).astype(jnp.bfloat16)
    assert jnp.allclose(scores_tensor.astype(jnp.float32),
                        ref.astype(jnp.float32), rtol=1e-2, atol=1e-2)
    assert jnp.all(final_scores[:, : S - 1, 0].astype(jnp.float32) == 0.0)
    assert jnp.allclose(final_scores[:, S - 1, 0].astype(jnp.float32),
                        ref.astype(jnp.float32), rtol=1e-2, atol=1e-2)
    assert jnp.all(last_token_indices == S - 1)


if __name__ == "__main__":
    key = jax.random.PRNGKey(0)

    # Small shape consistent with the module (single-tile path).
    B, S = 2, 8
    ids_small = jax.random.randint(key, (B, S), minval=0, maxval=1000, dtype=jnp.int32)
    outs_small = reward_from_function_forward(ids_small)
    jax.block_until_ready(outs_small)
    _check(ids_small, *outs_small)

    # Larger shape with forced small tiles: exercises the tiled grid, scratch
    # accumulation across S tiles, pl.when init/finalize, and the (B,1) output.
    key2 = jax.random.PRNGKey(0)
    B2, S2 = 16, 512
    ids_big = jax.random.randint(key2, (B2, S2), minval=0, maxval=32000, dtype=jnp.int32)
    outs_big = reward_from_function_forward(ids_big, tb_pref=16, ts_pref=128)
    jax.block_until_ready(outs_big)
    _check(ids_big, *outs_big)

    # Ragged shape: B not a multiple of the batch tile (clipped partial batch
    # block) and S not a multiple of the S tile (masked tail accumulation).
    key3 = jax.random.PRNGKey(0)
    B3, S3 = 18, 384
    ids_ragged = jax.random.randint(key3, (B3, S3), minval=0, maxval=32000, dtype=jnp.int32)
    outs_ragged = reward_from_function_forward(ids_ragged, tb_pref=16, ts_pref=256)
    jax.block_until_ready(outs_ragged)
    _check(ids_ragged, *outs_ragged)

    print("KERNEL_OK")
</pallas_src>

<mosaic_0001>
module attributes {stable_mosaic.version = 11 : i64} {
  func.func @_reward_kernel(%arg0: i32, %arg1: i32, %arg2: memref<2x8xi32, #tpu.memory_space<vmem>>, %arg3: memref<2x8xbf16, #tpu.memory_space<vmem>>, %arg4: memref<2x1xbf16, #tpu.memory_space<vmem>>, %arg5: memref<2x1xf32, #tpu.memory_space<vmem>>) attributes {dimension_semantics = [#tpu.dimension_semantics<parallel>, #tpu.dimension_semantics<arbitrary>], iteration_bounds = array<i64: 1, 1>, scalar_prefetch = 0 : i64, scratch_operands = 1 : i64, tpu.core_type = #tpu.core_type<tc>, window_params = [{transform_indices = @transform_0, window_bounds = array<i64: 2, 8>}, {transform_indices = @transform_1, window_bounds = array<i64: 2, 8>}, {transform_indices = @transform_2, window_bounds = array<i64: 2, 1>}]} {
    %c0_i32 = arith.constant 0 : i32
    %0 = arith.cmpi eq, %arg1, %c0_i32 : i32
    %1 = arith.extui %0 : i1 to i32
    %c0_i32_0 = arith.constant 0 : i32
    %2 = arith.cmpi ne, %1, %c0_i32_0 : i32
    scf.if %2 {
      %cst_11 = arith.constant 0.000000e+00 : f32
      %15 = vector.broadcast %cst_11 : f32 to vector<2x1xf32>
      %c0_12 = arith.constant 0 : index
      %c0_13 = arith.constant 0 : index
      %16 = vector.load %arg5[%c0_12, %c0_13] : memref<2x1xf32, #tpu.memory_space<vmem>>, vector<2x1xf32>
      tpu.vector_store %arg5[%c0_12, %c0_13], %15 {strides = array<i32>} : memref<2x1xf32, #tpu.memory_space<vmem>>, vector<2x1xf32>,
    } else {
    }
    %c0 = arith.constant 0 : index
    %c0_1 = arith.constant 0 : index
    %3 = vector.load %arg2[%c0, %c0_1] : memref<2x8xi32, #tpu.memory_space<vmem>>, vector<2x8xi32>
    %4 = arith.sitofp %3 : vector<2x8xi32> to vector<2x8xf32>
    %c0_2 = arith.constant 0 : index
    %c0_3 = arith.constant 0 : index
    %5 = vector.load %arg5[%c0_2, %c0_3] : memref<2x1xf32, #tpu.memory_space<vmem>>, vector<2x1xf32>
    %cst = arith.constant dense<0.000000e+00> : vector<2xf32>
    %6 = vector.multi_reduction <add>, %4, %cst [1] : vector<2x8xf32> to vector<2xf32>
    %7 = vector.shape_cast %6 : vector<2xf32> to vector<2x1xf32>
    %8 = arith.addf %5, %7 : vector<2x1xf32>
    %c0_4 = arith.constant 0 : index
    %c0_5 = arith.constant 0 : index
    %9 = vector.load %arg5[%c0_4, %c0_5] : memref<2x1xf32, #tpu.memory_space<vmem>>, vector<2x1xf32>
    tpu.vector_store %arg5[%c0_4, %c0_5], %8 {strides = array<i32>} : memref<2x1xf32, #tpu.memory_space<vmem>>, vector<2x1xf32>,
    %cst_6 = arith.constant 0.000000e+00 : bf16
    %10 = vector.broadcast %cst_6 : bf16 to vector<2x8xbf16>
    %c0_7 = arith.constant 0 : index
    %c0_8 = arith.constant 0 : index
    %11 = vector.load %arg3[%c0_7, %c0_8] : memref<2x8xbf16, #tpu.memory_space<vmem>>, vector<2x8xbf16>
    tpu.vector_store %arg3[%c0_7, %c0_8], %10 {strides = array<i32>} : memref<2x8xbf16, #tpu.memory_space<vmem>>, vector<2x8xbf16>,
    %c0_i32_9 = arith.constant 0 : i32
    %12 = arith.cmpi eq, %arg1, %c0_i32_9 : i32
    %13 = arith.extui %12 : i1 to i32
    %c0_i32_10 = arith.constant 0 : i32
    %14 = arith.cmpi ne, %13, %c0_i32_10 : i32
    scf.if %14 {
      %cst_11 = arith.constant 0.00999999977 : f32
      %cst_12 = arith.constant 8.000000e+00 : f32
      %15 = arith.divf %cst_11, %cst_12 : f32
      %c0_13 = arith.constant 0 : index
      %c0_14 = arith.constant 0 : index
      %16 = vector.load %arg5[%c0_13, %c0_14] : memref<2x1xf32, #tpu.memory_space<vmem>>, vector<2x1xf32>
      %17 = vector.broadcast %15 : f32 to vector<2x1xf32>
      %18 = arith.mulf %16, %17 : vector<2x1xf32>
      %19 = arith.truncf %18 : vector<2x1xf32> to vector<2x1xbf16>
      %c0_15 = arith.constant 0 : index
      %c7 = arith.constant 7 : index
      %20 = vector.load %arg3[%c0_15, %c7] : memref<2x8xbf16, #tpu.memory_space<vmem>>, vector<2x1xbf16>
      tpu.vector_store %arg3[%c0_15, %c7], %19 {strides = array<i32>} : memref<2x8xbf16, #tpu.memory_space<vmem>>, vector<2x1xbf16>,
      %c0_16 = arith.constant 0 : index
      %c0_17 = arith.constant 0 : index
      %21 = vector.load %arg4[%c0_16, %c0_17] : memref<2x1xbf16, #tpu.memory_space<vmem>>, vector<2x1xbf16>
      tpu.vector_store %arg4[%c0_16, %c0_17], %19 {strides = array<i32>} : memref<2x1xbf16, #tpu.memory_space<vmem>>, vector<2x1xbf16>,
    } else {
    }
    return
  }
  func.func @transform_0(%arg0: i32, %arg1: i32) -> (i32, i32) {
    %c0_i32 = arith.constant 0 : i32
    return %arg0, %arg1 : i32, i32
  }
  func.func @transform_1(%arg0: i32, %arg1: i32) -> (i32, i32) {
    %c0_i32 = arith.constant 0 : i32
    return %arg0, %arg1 : i32, i32
  }
  func.func @transform_2(%arg0: i32, %arg1: i32) -> (i32, i32) {
    %c0_i32 = arith.constant 0 : i32
    %c0_i32_0 = arith.constant 0 : i32
    return %arg0, %c0_i32 : i32, i32
  }
}

</mosaic_0001>

<llo_original>
// kernel: tpu_custom_call.1
$region0: #{tpu_custom_call.1}
  #allocation0 [shape = 'u32[]', space=smem, size = 0x4, offset = 0x4, fixed_abs, tag = 'smem constant byte address 0x4 - core index']
  #allocation1 [shape = 'u32[72,128]{1,0:T(1,128)}', space=vmem, size = 0x9000, scoped, tag = 'internal scratch']
  #allocation2 [shape = 'f32[2,1]{1,0:T(2,128)}', space=vmem, size = 0x400, scoped, tag = 'scratch operand']
  %s0 = inlined_call_operand.hbm [shape: s32[2,8], index: 0, kind: input, shape index: {}]
  %s1 = inlined_call_operand.hbm [shape: bf16[2,8], index: 1, kind: output, shape index: {0}]
  %s2 = inlined_call_operand.hbm [shape: bf16[2,1], index: 2, kind: output, shape index: {1}]
  %3 = xla_tuple %s1, %s2
  %s4 = sld [smem:[#allocation0]]
  $region34: #{tpu_custom_call.1} parent=0
    _
  %s6 = ssub.s32 1, %s4
  %s7 = scalar_select 0, %s6, %s4
  $region1: #{tpu_custom_call.1} parent=0
    #allocation3 [shape = 'u8[1024]{0}', space=vmem, size = 0x400, scoped, tag = 'input window, operand 0, single buffered']
    #allocation4 [shape = 's32[1]{0}', space=sflag, size = 0x4, scoped, tag = 'scoped memory for tpu_custom_call.1']
    #allocation5 [shape = 's32[1]{0}', space=sflag, size = 0x4, scoped, tag = 'scoped memory for tpu_custom_call.1']
    #allocation6 [shape = 'u8[512]{0}', space=vmem, size = 0x400, scoped, tag = 'output window, operand 0, single buffered']
    #allocation7 [shape = 'u8[512]{0}', space=vmem, size = 0x400, scoped, tag = 'output window, operand 1, single buffered']
    #allocation8 [shape = 's32[1]{0}', space=sflag, size = 0x4, scoped, tag = 'scoped memory for tpu_custom_call.1']
    %8 = vsyncpa [#allocation4], 0
    %9 = vsyncpa [#allocation5], 0
    %10 = vsyncpa [#allocation8], 0
    // Predicated region
    $region2: #{tpu_custom_call.1} parent=1 // pred_check
      _
    $region3: #{tpu_custom_call.1} parent=1 // pred_check_branch
      %12 = sbr.rel (0) target = $region5
    $region4: #{tpu_custom_call.1} parent=1 // pred_region
      %14 = vsyncadd [#allocation4], 0
      %s16 = sshll.u32 %s0, 4
      %s17 = int_to_ptr.hbm [resolvable:$true] %s16
      %s18 = sshll.u32 [#allocation3], 4
      %s19 = int_to_ptr.vmem [resolvable:$true] %s18
      %21 = dma.hbm_to_vmem [thread:$0]  %s17, 32, %s19, [#allocation4]
    $region5: #{tpu_custom_call.1} parent=1 // pred_fallthru
      _
    // Predicated region
    $region6: #{tpu_custom_call.1} parent=1 // pred_check
      _
    $region7: #{tpu_custom_call.1} parent=1 // pred_check_branch
      %23 = sbr.rel (0) target = $region9
    $region8: #{tpu_custom_call.1} parent=1 // pred_region
      %25 = dma.done [#allocation4], 32
    $region9: #{tpu_custom_call.1} parent=1 // pred_fallthru
      _
    %p27 = scmp.eq.s32.totalorder 0, 0
    // Predicated region
    $region10: #{tpu_custom_call.1} parent=1 // pred_check
      %p28 = pneg %p27
    $region11: #{tpu_custom_call.1} parent=1 // pred_check_branch
      %30 = sbr.rel (%p28) target = $region13
    $region12: #{tpu_custom_call.1} parent=1 // pred_region
      %vm31 = vcmask 1024
      %32 = vst.msk [vmem:[#allocation2] sm:$0x3] %vm31, 0.0
    $region13: #{tpu_custom_call.1} parent=1 // pred_fallthru
      _
    %v33 = vld [vmem:[#allocation3] sm:$0x3]
    %v34 = vcvt.s32.f32 %v33
    %v35 = vld [vmem:[#allocation2] sm:$0x3]
    %vm36 = vcmask 58368
    %v37 = vsel %vm36, %v34, 0.0
    %38 = vadd.xlane.f32.xlu0 %v37
    %v39 = vpop.xlane.xlu0 %38
    %v40 = vadd.f32 %v35, %v39
    %vm41 = vcmask 1024
    %42 = vst.msk [vmem:[#allocation2] sm:$0x3] %vm41, %v40
    %vm43 = vcmask 57344
    %44 = vst.msk [vmem:[#allocation6] sm:$0x1] %vm43, 0
    // Predicated region
    $region14: #{tpu_custom_call.1} parent=1 // pred_check
      %p45 = pneg %p27
    $region15: #{tpu_custom_call.1} parent=1 // pred_check_branch
      %47 = sbr.rel (%p45) target = $region17
    $region16: #{tpu_custom_call.1} parent=1 // pred_region
      %v48 = vld [vmem:[#allocation2] sm:$0x3]
      %v49 = vmul.f32 %v48, 0.00125
      %v50 = vpack.c.bf16 %v49, %v49
      %v52 = vrot.slane %v50, 3
      %vm53 = vcmask 1040384
      %v56 = vsel %vm53, %v50, %v52
      %58 = vrot.lane.b32.xlu0 %v56, 7
      %v59 = vpop.permute.xlu0 %58
      %vm61 = vcmask 57400
      %62 = vst.msk [vmem:[#allocation6] sm:$0x1] %vm61, %v59
      %vm63 = vcmask 0
      %64 = vst.msk [vmem:[#allocation7] sm:$0x1] %vm63, %v50
    $region17: #{tpu_custom_call.1} parent=1 // pred_fallthru
      _
    // Predicated region
    $region18: #{tpu_custom_call.1} parent=1 // pred_check
      _
    $region19: #{tpu_custom_call.1} parent=1 // pred_check_branch
      %66 = sbr.rel (0) target = $region21
    $region20: #{tpu_custom_call.1} parent=1 // pred_region
      %68 = vsyncadd [#allocation5], 0
      %s70 = sshll.u32 [#allocation6], 4
      %s71 = int_to_ptr.vmem [resolvable:$true] %s70
      %s72 = sshll.u32 %s1, 4
      %s73 = int_to_ptr.hbm [resolvable:$true] %s72
      %75 = dma.vmem_to_hbm [thread:$0]  %s71, 16, %s73, [#allocation5]
    $region21: #{tpu_custom_call.1} parent=1 // pred_fallthru
      _
    // Predicated region
    $region22: #{tpu_custom_call.1} parent=1 // pred_check
      _
    $region23: #{tpu_custom_call.1} parent=1 // pred_check_branch
      %77 = sbr.rel (0) target = $region25
    $region24: #{tpu_custom_call.1} parent=1 // pred_region
      %79 = vsyncadd [#allocation8], 0
      %s81 = sshll.u32 [#allocation7], 4
      %s82 = int_to_ptr.vmem [resolvable:$true] %s81
      %s83 = sshll.u32 %s2, 4
      %s84 = int_to_ptr.hbm [resolvable:$true] %s83
      %86 = dma.vmem_to_hbm [thread:$0]  %s82, 16, %s84, [#allocation8]
    $region25: #{tpu_custom_call.1} parent=1 // pred_fallthru
      _
    // Predicated region
    $region26: #{tpu_custom_call.1} parent=1 // pred_check
      _
    $region27: #{tpu_custom_call.1} parent=1 // pred_check_branch
      %88 = sbr.rel (0) target = $region29
    $region28: #{tpu_custom_call.1} parent=1 // pred_region
      %90 = dma.done [#allocation5], 16
    $region29: #{tpu_custom_call.1} parent=1 // pred_fallthru
      _
    // Predicated region
    $region30: #{tpu_custom_call.1} parent=1 // pred_check
      _
    $region31: #{tpu_custom_call.1} parent=1 // pred_check_branch
      %92 = sbr.rel (0) target = $region33
    $region32: #{tpu_custom_call.1} parent=1 // pred_region
      %94 = dma.done [#allocation8], 16
    $region33: #{tpu_custom_call.1} parent=1 // pred_fallthru
      _
    %95 = vsyncpa [#allocation4], 1
    %96 = vsyncpa [#allocation5], 1
    %97 = vsyncpa [#allocation8], 1

</llo_original>
